<compile_context>
chip_gen: v6e
topology: v6e:2x2x1
jax: 0.10.0
libtpu: 0.0.40
codegen_flags: <defaults>
</compile_context>

<pallas_src>
import functools

import jax
import jax.numpy as jnp
from jax.experimental import pallas as pl
from jax.experimental.pallas import tpu as pltpu


def scalar_head_pool_kernel(x_ref, seg_ref, w1_ref, b1_ref, acc_ref):
    # x_ref:   [TN, D]    one row-tile of node features (cast to bf16 for the MXU)
    # seg_ref: [1, TN]    int32 graph id per node (-1 on padded rows)
    # w1_ref:  [D, H]     b1_ref: [1, H]
    # acc_ref: [G, H+1]   per-core partial slab: [:, :H] = sum of SiLU(x W1 + b1),
    #                     [:, H:] = node counts.  Resident across the inner grid axis.
    i = pl.program_id(1)                          # inner (row-tile reduction) axis

    @pl.when(i == 0)
    def _init():
        acc_ref[...] = jnp.zeros_like(acc_ref)

    # ---- Linear(D -> H) + SiLU: bf16 MXU inputs, f32 accumulation.
    #      If the producer already supplies bf16 x, the cast is a no-op.
    x = x_ref[...].astype(jnp.bfloat16)                           # [TN, D]
    w1 = w1_ref[...].astype(jnp.bfloat16)                         # [D, H]
    h = jnp.dot(x, w1, preferred_element_type=jnp.float32) + b1_ref[...]
    h = h * jax.nn.sigmoid(h)                                     # SiLU, [TN, H] f32

    TN = x_ref.shape[0]
    G = acc_ref.shape[0]
    H = h.shape[1]

    # ---- Per-tile segment pooling via a [G, TN] one-hot matmul.  one_hot values
    #      (0/1) are exact in bf16; accumulation stays f32.  Padded rows (seg == -1)
    #      match no graph id and contribute nothing.
    seg = seg_ref[...]                                            # [1, TN] int32
    g_ids = jax.lax.broadcasted_iota(jnp.int32, (G, TN), 0)       # [G, TN]
    one_hot = (g_ids == seg).astype(jnp.bfloat16)                 # [G, TN]
    # NOTE: for large G, replace the dense one_hot with scalar-prefetched per-graph
    # row offsets (seg is sorted) or a G-tiled grid axis.

    h_b = h.astype(jnp.bfloat16)                                  # [TN, H]
    ones_col = jnp.ones((TN, 1), jnp.bfloat16)                    # [TN, 1]

    # Hidden sums and counts both go through the MXU (no XLU lane reduce over TN).
    acc_ref[:, :H] += jnp.dot(one_hot, h_b, preferred_element_type=jnp.float32)
    acc_ref[:, H:] += jnp.dot(one_hot, ones_col, preferred_element_type=jnp.float32)


def _round_up(a, b):
    return -(-a // b) * b


@functools.partial(jax.jit, static_argnames=("num_graphs", "block_rows", "core_splits"))
def scalar_head(x, w1, b1, w2, b2, seg, *, num_graphs, block_rows=4096, core_splits=2):
    """Scalar_head forward: scatter_mean(Linear2(SiLU(Linear1(x))), seg) -> [G, 1].

    x: [N, dim_in] (f32 or bf16), w1: [dim_in, H], b1: [H], w2: [H, 1], b2: [1],
    seg: [N] int graph ids.  Returns [num_graphs, 1] f32.
    """
    N, D = x.shape
    H = w1.shape[1]
    G = int(num_graphs)
    cores = max(1, int(core_splits))

    # Row-tile size: multiple of 128 (seg rides on the lane axis), capped at N's
    # padded extent.  Default 4096 keeps per-grid-step overhead amortized and stays
    # inside every generation's default scoped VMEM.
    tn = max(128, min(int(block_rows), _round_up(N, 128)))
    tn = (tn // 128) * 128
    n_pad = _round_up(N, tn * cores)
    tiles_per_core = n_pad // (tn * cores)

    if n_pad != N:
        x = jnp.pad(x, ((0, n_pad - N), (0, 0)))
        seg = jnp.pad(seg, (0, n_pad - N), constant_values=-1)   # pad rows match no graph
    seg_row = seg.reshape(1, n_pad).astype(jnp.int32)

    grid_spec = pltpu.PrefetchScalarGridSpec(
        num_scalar_prefetch=0,
        grid=(cores, tiles_per_core),                 # (parallel cores, row tiles)
        in_specs=[
            pl.BlockSpec((tn, D), lambda c, i: (c * tiles_per_core + i, 0)),  # x rows
            pl.BlockSpec((1, tn), lambda c, i: (0, c * tiles_per_core + i)),  # seg ids
            pl.BlockSpec((D, H), lambda c, i: (0, 0)),                        # w1 (resident)
            pl.BlockSpec((1, H), lambda c, i: (0, 0)),                        # b1
        ],
        # Per-core partial slab: block index depends only on c, so it stays resident
        # (accumulator) across the inner axis and each core writes its own slab.
        out_specs=pl.BlockSpec((None, G, H + 1), lambda c, i: (c, 0, 0)),
    )

    partials = pl.pallas_call(
        scalar_head_pool_kernel,
        out_shape=jax.ShapeDtypeStruct((cores, G, H + 1), jnp.float32),
        grid_spec=grid_spec,
        compiler_params=pltpu.CompilerParams(
            dimension_semantics=("parallel", "arbitrary"),
            # v5e's default scoped VMEM is 16 MiB; only raise the limit when large
            # row tiles actually need it (fits v6e/v7x headroom too).
            vmem_limit_bytes=(48 * 1024 * 1024 if tn > 4096 else None),
        ),
    )(x, seg_row, w1, b1.reshape(1, H))

    # ---- Tiny epilogue ([G, H+1] work): combine per-core partials, take the mean,
    #      apply the affine Linear(H -> 1).  mean(h W2 + b2) == mean(h) W2 + b2.
    pooled = jnp.sum(partials, axis=0)                    # [G, H+1]
    sums, counts = pooled[:, :H], pooled[:, H:]           # [G, H], [G, 1]
    mean_h = sums / jnp.maximum(counts, 1.0)
    y = mean_h @ w2.reshape(H, 1) + b2.reshape(1, 1)      # [G, 1]
    # Empty graphs: scatter_mean returns 0 (not b2).
    return jnp.where(counts > 0, y, 0.0)


def scalar_head_ref(x, w1, b1, w2, b2, seg, num_graphs, *, mirror_kernel=False):
    """Pure-JAX reference.  mirror_kernel=True mirrors the kernel's bf16 MXU inputs."""
    if mirror_kernel:
        h = jnp.dot(x.astype(jnp.bfloat16), w1.astype(jnp.bfloat16),
                    preferred_element_type=jnp.float32) + b1
        h = h * jax.nn.sigmoid(h)
        h = h.astype(jnp.bfloat16).astype(jnp.float32)    # pooling-matmul input rounding
    else:
        h = x @ w1 + b1
        h = h * jax.nn.sigmoid(h)
    sums = jax.ops.segment_sum(h, seg, num_segments=num_graphs)             # [G, H]
    counts = jax.ops.segment_sum(jnp.ones((x.shape[0],), jnp.float32), seg,
                                 num_segments=num_graphs)[:, None]           # [G, 1]
    mean_h = sums / jnp.maximum(counts, 1.0)
    y = mean_h @ w2.reshape(-1, 1) + b2.reshape(1, 1)
    return jnp.where(counts > 0, y, 0.0)


if __name__ == "__main__":
    key = jax.random.PRNGKey(0)
    k_x, k_w1, k_b1, k_w2, k_b2 = jax.random.split(key, 5)

    # Small shapes consistent with the module: dim_in=32, 300 nodes, 4 graphs.
    dim_in = 32
    hidden = dim_in // 2
    num_graphs = 4
    sizes = (96, 75, 80, 49)                  # nodes per graph, sum = 300
    N = sum(sizes)

    x = jax.random.normal(k_x, (N, dim_in), dtype=jnp.float32)
    # Weights stored as [in, out] (i.e. x @ W + b), matching nn.Linear semantics.
    w1 = jax.random.normal(k_w1, (dim_in, hidden), dtype=jnp.float32) * 0.1
    b1 = jax.random.normal(k_b1, (hidden,), dtype=jnp.float32) * 0.1
    w2 = jax.random.normal(k_w2, (hidden, 1), dtype=jnp.float32) * 0.1
    b2 = jax.random.normal(k_b2, (1,), dtype=jnp.float32) * 0.1

    # batch.batch: sorted graph id per node (as produced by PyG batching).
    seg = jnp.concatenate(
        [jnp.full((s,), g, dtype=jnp.int32) for g, s in enumerate(sizes)])

    # block_rows=128 (grid=(2, 2) at N=300) exercises the tiled, multi-core-split
    # accumulator path; the production default is block_rows=4096.
    out = scalar_head(x, w1, b1, w2, b2, seg,
                      num_graphs=num_graphs, block_rows=128, core_splits=2)
    out = jax.block_until_ready(out)
    assert out.shape == (num_graphs, 1)

    # Tight check against a reference mirroring the kernel's bf16 MXU inputs, plus a
    # looser check against the pure-fp32 reference (bf16 input rounding only).
    ref_mirror = scalar_head_ref(x, w1, b1, w2, b2, seg, num_graphs, mirror_kernel=True)
    ref_f32 = scalar_head_ref(x, w1, b1, w2, b2, seg, num_graphs, mirror_kernel=False)
    assert jnp.allclose(out, ref_mirror, atol=1e-4, rtol=1e-4), (out, ref_mirror)
    assert jnp.allclose(out, ref_f32, atol=2e-2, rtol=2e-2), (out, ref_f32)

    print("KERNEL_OK")
</pallas_src>

<mosaic_0001>
module attributes {stable_mosaic.version = 11 : i64} {
  func.func @scalar_head_pool_kernel(%arg0: i32, %arg1: i32, %arg2: memref<128x32xf32, #tpu.memory_space<vmem>>, %arg3: memref<1x128xi32, #tpu.memory_space<vmem>>, %arg4: memref<32x16xf32, #tpu.memory_space<vmem>>, %arg5: memref<1x16xf32, #tpu.memory_space<vmem>>, %arg6: memref<1x4x17xf32, #tpu.memory_space<vmem>>) attributes {dimension_semantics = [#tpu.dimension_semantics<parallel>, #tpu.dimension_semantics<arbitrary>], iteration_bounds = array<i64: 2, 2>, scalar_prefetch = 0 : i64, scratch_operands = 0 : i64, tpu.core_type = #tpu.core_type<tc>, window_params = [{transform_indices = @transform_0, window_bounds = array<i64: 128, 32>}, {transform_indices = @transform_1, window_bounds = array<i64: 1, 128>}, {pipeline_mode = #tpu.pipeline_mode<synchronous>, transform_indices = @transform_2, window_bounds = array<i64: 32, 16>}, {pipeline_mode = #tpu.pipeline_mode<synchronous>, transform_indices = @transform_3, window_bounds = array<i64: 1, 16>}, {transform_indices = @transform_4, window_bounds = array<i64: 1, 4, 17>}]} {
    %c0_i32 = arith.constant 0 : i32
    %0 = arith.cmpi eq, %arg1, %c0_i32 : i32
    %1 = arith.extui %0 : i1 to i32
    %c0_i32_0 = arith.constant 0 : i32
    %2 = arith.cmpi ne, %1, %c0_i32_0 : i32
    scf.if %2 {
      %cst_23 = arith.constant 0.000000e+00 : f32
      %40 = vector.broadcast %cst_23 : f32 to vector<4x17xf32>
      %c0_24 = arith.constant 0 : index
      %c0_25 = arith.constant 0 : index
      %c0_26 = arith.constant 0 : index
      %41 = vector.load %arg6[%c0_24, %c0_25, %c0_26] : memref<1x4x17xf32, #tpu.memory_space<vmem>>, vector<1x4x17xf32>
      %42 = vector.shape_cast %41 : vector<1x4x17xf32> to vector<4x17xf32>
      %43 = vector.shape_cast %40 : vector<4x17xf32> to vector<1x4x17xf32>
      tpu.vector_store %arg6[%c0_24, %c0_25, %c0_26], %43 {strides = array<i32>} : memref<1x4x17xf32, #tpu.memory_space<vmem>>, vector<1x4x17xf32>,
    } else {
    }
    %c0 = arith.constant 0 : index
    %c0_1 = arith.constant 0 : index
    %3 = vector.load %arg2[%c0, %c0_1] : memref<128x32xf32, #tpu.memory_space<vmem>>, vector<128x32xf32>
    %4 = arith.truncf %3 : vector<128x32xf32> to vector<128x32xbf16>
    %c0_2 = arith.constant 0 : index
    %c0_3 = arith.constant 0 : index
    %5 = vector.load %arg4[%c0_2, %c0_3] : memref<32x16xf32, #tpu.memory_space<vmem>>, vector<32x16xf32>
    %6 = arith.truncf %5 : vector<32x16xf32> to vector<32x16xbf16>
    %cst = arith.constant dense<0.000000e+00> : vector<128x16xf32>
    %7 = tpu.matmul %4, %6, %cst {dimension_numbers = #tpu.dot_dimension_numbers<[1], [0], [0], [1], [0, 0, 1, 1], [], []>} : vector<128x32xbf16>, vector<32x16xbf16>, vector<128x16xf32> -> vector<128x16xf32>
    %c0_4 = arith.constant 0 : index
    %c0_5 = arith.constant 0 : index
    %8 = vector.load %arg5[%c0_4, %c0_5] : memref<1x16xf32, #tpu.memory_space<vmem>>, vector<1x16xf32>
    %9 = vector.broadcast %8 : vector<1x16xf32> to vector<128x16xf32>
    %10 = arith.addf %7, %9 : vector<128x16xf32>
    %11 = arith.negf %10 : vector<128x16xf32>
    %12 = math.exp %11 : vector<128x16xf32>
    %cst_6 = arith.constant 1.000000e+00 : f32
    %13 = vector.broadcast %cst_6 : f32 to vector<128x16xf32>
    %14 = arith.addf %13, %12 : vector<128x16xf32>
    %15 = arith.divf %13, %14 : vector<128x16xf32>
    %16 = arith.mulf %10, %15 : vector<128x16xf32>
    %c0_7 = arith.constant 0 : index
    %c0_8 = arith.constant 0 : index
    %17 = vector.load %arg3[%c0_7, %c0_8] : memref<1x128xi32, #tpu.memory_space<vmem>>, vector<1x128xi32>
    %18 = tpu.iota {dimensions = array<i32: 0>} : vector<4x128xi32>
    %19 = vector.broadcast %17 : vector<1x128xi32> to vector<4x128xi32>
    %20 = arith.cmpi eq, %18, %19 : vector<4x128xi32>
    %21 = arith.extui %20 : vector<4x128xi1> to vector<4x128xi32>
    %22 = arith.sitofp %21 : vector<4x128xi32> to vector<4x128xf32>
    %23 = arith.truncf %22 : vector<4x128xf32> to vector<4x128xbf16>
    %24 = arith.truncf %16 : vector<128x16xf32> to vector<128x16xbf16>
    %cst_9 = arith.constant 1.000000e+00 : bf16
    %25 = vector.broadcast %cst_9 : bf16 to vector<128x1xbf16>
    %c0_10 = arith.constant 0 : index
    %c0_11 = arith.constant 0 : index
    %c0_12 = arith.constant 0 : index
    %26 = vector.load %arg6[%c0_10, %c0_11, %c0_12] : memref<1x4x17xf32, #tpu.memory_space<vmem>>, vector<1x4x16xf32>
    %27 = vector.shape_cast %26 : vector<1x4x16xf32> to vector<4x16xf32>
    %cst_13 = arith.constant dense<0.000000e+00> : vector<4x16xf32>
    %28 = tpu.matmul %23, %24, %cst_13 {dimension_numbers = #tpu.dot_dimension_numbers<[1], [0], [0], [1], [0, 0, 1, 1], [], []>} : vector<4x128xbf16>, vector<128x16xbf16>, vector<4x16xf32> -> vector<4x16xf32>
    %29 = arith.addf %27, %28 : vector<4x16xf32>
    %c0_14 = arith.constant 0 : index
    %c0_15 = arith.constant 0 : index
    %c0_16 = arith.constant 0 : index
    %30 = vector.load %arg6[%c0_14, %c0_15, %c0_16] : memref<1x4x17xf32, #tpu.memory_space<vmem>>, vector<1x4x16xf32>
    %31 = vector.shape_cast %30 : vector<1x4x16xf32> to vector<4x16xf32>
    %32 = vector.shape_cast %29 : vector<4x16xf32> to vector<1x4x16xf32>
    tpu.vector_store %arg6[%c0_14, %c0_15, %c0_16], %32 {strides = array<i32>} : memref<1x4x17xf32, #tpu.memory_space<vmem>>, vector<1x4x16xf32>,
    %c0_17 = arith.constant 0 : index
    %c0_18 = arith.constant 0 : index
    %c16 = arith.constant 16 : index
    %33 = vector.load %arg6[%c0_17, %c0_18, %c16] : memref<1x4x17xf32, #tpu.memory_space<vmem>>, vector<1x4x1xf32>
    %34 = vector.shape_cast %33 : vector<1x4x1xf32> to vector<4x1xf32>
    %cst_19 = arith.constant dense<0.000000e+00> : vector<4x1xf32>
    %35 = tpu.matmul %23, %25, %cst_19 {dimension_numbers = #tpu.dot_dimension_numbers<[1], [0], [0], [1], [0, 0, 1, 1], [], []>} : vector<4x128xbf16>, vector<128x1xbf16>, vector<4x1xf32> -> vector<4x1xf32>
    %36 = arith.addf %34, %35 : vector<4x1xf32>
    %c0_20 = arith.constant 0 : index
    %c0_21 = arith.constant 0 : index
    %c16_22 = arith.constant 16 : index
    %37 = vector.load %arg6[%c0_20, %c0_21, %c16_22] : memref<1x4x17xf32, #tpu.memory_space<vmem>>, vector<1x4x1xf32>
    %38 = vector.shape_cast %37 : vector<1x4x1xf32> to vector<4x1xf32>
    %39 = vector.shape_cast %36 : vector<4x1xf32> to vector<1x4x1xf32>
    tpu.vector_store %arg6[%c0_20, %c0_21, %c16_22], %39 {strides = array<i32>} : memref<1x4x17xf32, #tpu.memory_space<vmem>>, vector<1x4x1xf32>,
    return
  }
  func.func @transform_0(%arg0: i32, %arg1: i32) -> (i32, i32) {
    %c2_i32 = arith.constant 2 : i32
    %0 = arith.muli %arg0, %c2_i32 : i32
    %1 = arith.addi %0, %arg1 : i32
    %c0_i32 = arith.constant 0 : i32
    %c0_i32_0 = arith.constant 0 : i32
    return %1, %c0_i32 : i32, i32
  }
  func.func @transform_1(%arg0: i32, %arg1: i32) -> (i32, i32) {
    %c2_i32 = arith.constant 2 : i32
    %0 = arith.muli %arg0, %c2_i32 : i32
    %1 = arith.addi %0, %arg1 : i32
    %c0_i32 = arith.constant 0 : i32
    %c0_i32_0 = arith.constant 0 : i32
    return %c0_i32, %1 : i32, i32
  }
  func.func @transform_2(%arg0: i32, %arg1: i32) -> (i32, i32) {
    %c0_i32 = arith.constant 0 : i32
    %c0_i32_0 = arith.constant 0 : i32
    %c0_i32_1 = arith.constant 0 : i32
    return %c0_i32, %c0_i32_0 : i32, i32
  }
  func.func @transform_3(%arg0: i32, %arg1: i32) -> (i32, i32) {
    %c0_i32 = arith.constant 0 : i32
    %c0_i32_0 = arith.constant 0 : i32
    %c0_i32_1 = arith.constant 0 : i32
    return %c0_i32, %c0_i32_0 : i32, i32
  }
  func.func @transform_4(%arg0: i32, %arg1: i32) -> (i32, i32, i32) {
    %c0_i32 = arith.constant 0 : i32
    %c0_i32_0 = arith.constant 0 : i32
    %c0_i32_1 = arith.constant 0 : i32
    return %arg0, %c0_i32, %c0_i32_0 : i32, i32, i32
  }
}

</mosaic_0001>

<llo_original>
// kernel: scalar_head.1
$region0: #{scalar_head.1}
  #allocation0 [shape = 'u32[]', space=smem, size = 0x4, offset = 0x4, fixed_abs, tag = 'smem constant byte address 0x4 - core index']
  #allocation1 [shape = 'u32[144,128]{1,0:T(1,128)}', space=vmem, size = 0x12000, scoped, tag = 'internal scratch']
  %s0 = inlined_call_operand.vmem [shape: f32[512,32], index: 0, kind: input, shape index: {}]
  %s1 = inlined_call_operand.vmem [shape: s32[1,512], index: 1, kind: input, shape index: {}]
  %s2 = inlined_call_operand.vmem [shape: f32[32,16], index: 2, kind: input, shape index: {}]
  %s3 = inlined_call_operand.vmem [shape: f32[1,16], index: 3, kind: input, shape index: {}]
  %s4 = inlined_call_operand.vmem [shape: f32[2,4,17], index: 4, kind: output, shape index: {}]
  %s5 = sld [smem:[#allocation0]]
  $region53: #{scalar_head.1} parent=0
    _
  %s7 = ssub.s32 1, %s5
  %s8 = scalar_select 0, %s7, %s5
  loop: start=0, step=1, limit=6
  $region2: #{scalar_head.1} parent=0 // loop_pre_header
    _
  $region3: #{scalar_head.1} parent=0 // loop_header
    %s10 = sphi 0, %s14
    %p11 = scmp.ge.s32.totalorder %s10, 6
    %s17 = sphi 0, %s29
    %s18 = sphi 0, %s25
    %s19 = sphi 0, %s17
    %s20 = sphi 0, %s18
    %s21 = sphi 0, %s19
    %s22 = sphi 0, %s20
    %s36 = sphi 0, %s38
    %s39 = sphi 0, %s36
    %s40 = sphi 0, %s39
    %s56 = sphi 0, %s40
    %s66 = sphi 0, %s68
    %s69 = sphi 0, %s66
    %s70 = sphi 0, %s69
    %s86 = sphi 0, %s70
    %s90 = sphi 0, %s90
    %s92 = sphi 0, %s90
    %s93 = sphi 0, %s92
    %s107 = sphi 0, %s93
    %s111 = sphi 0, %s111
    %s113 = sphi 0, %s111
    %s114 = sphi 0, %s113
    %s128 = sphi 0, %s114
    %s134 = sphi 0, %s136
    %s137 = sphi 0, %s134
    %s138 = sphi 0, %s137
    %s154 = sphi 0, %s138
  $region4: #{scalar_head.1} parent=0 // loop_header_branch
    %13 = sbr.rel (%p11) target = $region8
  $region5: #{scalar_head.1} parent=0 // loop_body
    %s15 = ssub.s32 %s10, 1
    %s16 = ssub.s32 %s10, 2
    %s23 = sadd.s32 1, %s18
    %p24 = scmp.ge.s32.totalorder %s23, 2
    %s25 = scalar_select %p24, 0, %s23
    %s26 = sadd.s32 1, %s17
    %s27 = scalar_select %p24, %s26, %s17
    %p28 = scmp.ge.s32.totalorder %s27, 2
    %s29 = scalar_select %p28, 0, %s27
    %s30 = smul.u32 %s17, 2
    %s31 = sadd.s32 %s30, %s18
    %s32 = smul.u32 %s29, 2
    %s33 = sadd.s32 %s32, %s25
    %s34 = ssub.s32 %s31, %s33
    %p35 = scmp.eq.s32.totalorder %s34, 0
    %s37 = sadd.s32 %s36, 1
    %s38 = scalar_select %p35, %s36, %s37
    %p41 = pneg %p35
    %p42 = scmp.eq.s32.totalorder %s10, 3
    %p43 = por %p41, %p42
    %p44 = scmp.ne.s32.totalorder %s36, %s39
    %p45 = scmp.eq.s32.totalorder %s10, 0
    %p46 = por %p44, %p45
    %p47 = scmp.ne.s32.totalorder %s36, %s39
    %p48 = scmp.eq.s32.totalorder %s15, 3
    %p49 = por %p47, %p48
    %p50 = scmp.ne.s32.totalorder %s39, %s40
    %p51 = scmp.eq.s32.totalorder %s15, 0
    %p52 = por %p50, %p51
    %p53 = scmp.ne.s32.totalorder %s39, %s40
    %p54 = scmp.eq.s32.totalorder %s16, 3
    %p55 = por %p53, %p54
    %p57 = scmp.ne.s32.totalorder %s40, %s56
    %p58 = scmp.eq.s32.totalorder %s16, 0
    %p59 = por %p57, %p58
    %s60 = smul.u32 %s17, 2
    %s61 = sadd.s32 %s60, %s18
    %s62 = smul.u32 %s29, 2
    %s63 = sadd.s32 %s62, %s25
    %s64 = ssub.s32 %s61, %s63
    %p65 = scmp.eq.s32.totalorder %s64, 0
    %s67 = sadd.s32 %s66, 1
    %s68 = scalar_select %p65, %s66, %s67
    %p71 = pneg %p65
    %p72 = scmp.eq.s32.totalorder %s10, 3
    %p73 = por %p71, %p72
    %p74 = scmp.ne.s32.totalorder %s66, %s69
    %p75 = scmp.eq.s32.totalorder %s10, 0
    %p76 = por %p74, %p75
    %p77 = scmp.ne.s32.totalorder %s66, %s69
    %p78 = scmp.eq.s32.totalorder %s15, 3
    %p79 = por %p77, %p78
    %p80 = scmp.ne.s32.totalorder %s69, %s70
    %p81 = scmp.eq.s32.totalorder %s15, 0
    %p82 = por %p80, %p81
    %p83 = scmp.ne.s32.totalorder %s69, %s70
    %p84 = scmp.eq.s32.totalorder %s16, 3
    %p85 = por %p83, %p84
    %p87 = scmp.ne.s32.totalorder %s70, %s86
    %p88 = scmp.eq.s32.totalorder %s16, 0
    %p89 = por %p87, %p88
    %s91 = sadd.s32 %s90, 1
    %p94 = scmp.eq.s32.totalorder %s10, 3
    %p95 = scmp.ne.s32.totalorder %s90, %s92
    %p96 = scmp.eq.s32.totalorder %s10, 0
    %p97 = por %p95, %p96
    %p98 = scmp.ne.s32.totalorder %s90, %s92
    %p99 = scmp.eq.s32.totalorder %s15, 3
    %p100 = por %p98, %p99
    %p101 = scmp.ne.s32.totalorder %s92, %s93
    %p102 = scmp.eq.s32.totalorder %s15, 0
    %p103 = por %p101, %p102
    %p104 = scmp.ne.s32.totalorder %s92, %s93
    %p105 = scmp.eq.s32.totalorder %s16, 3
    %p106 = por %p104, %p105
    %p108 = scmp.ne.s32.totalorder %s93, %s107
    %p109 = scmp.eq.s32.totalorder %s16, 0
    %p110 = por %p108, %p109
    %s112 = sadd.s32 %s111, 1
    %p115 = scmp.eq.s32.totalorder %s10, 3
    %p116 = scmp.ne.s32.totalorder %s111, %s113
    %p117 = scmp.eq.s32.totalorder %s10, 0
    %p118 = por %p116, %p117
    %p119 = scmp.ne.s32.totalorder %s111, %s113
    %p120 = scmp.eq.s32.totalorder %s15, 3
    %p121 = por %p119, %p120
    %p122 = scmp.ne.s32.totalorder %s113, %s114
    %p123 = scmp.eq.s32.totalorder %s15, 0
    %p124 = por %p122, %p123
    %p125 = scmp.ne.s32.totalorder %s113, %s114
    %p126 = scmp.eq.s32.totalorder %s16, 3
    %p127 = por %p125, %p126
    %p129 = scmp.ne.s32.totalorder %s114, %s128
    %p130 = scmp.eq.s32.totalorder %s16, 0
    %p131 = por %p129, %p130
    %s132 = ssub.s32 %s17, %s29
    %p133 = scmp.eq.s32.totalorder %s132, 0
    %s135 = sadd.s32 %s134, 1
    %s136 = scalar_select %p133, %s134, %s135
    %p139 = pneg %p133
    %p140 = scmp.eq.s32.totalorder %s10, 3
    %p141 = por %p139, %p140
    %p142 = scmp.ne.s32.totalorder %s134, %s137
    %p143 = scmp.eq.s32.totalorder %s10, 0
    %p144 = por %p142, %p143
    %p145 = scmp.ne.s32.totalorder %s134, %s137
    %p146 = scmp.eq.s32.totalorder %s15, 3
    %p147 = por %p145, %p146
    %p148 = scmp.ne.s32.totalorder %s137, %s138
    %p149 = scmp.eq.s32.totalorder %s15, 0
    %p150 = por %p148, %p149
    %p151 = scmp.ne.s32.totalorder %s137, %s138
    %p152 = scmp.eq.s32.totalorder %s16, 3
    %p153 = por %p151, %p152
    %p155 = scmp.ne.s32.totalorder %s138, %s154
    %p156 = scmp.eq.s32.totalorder %s16, 0
    %p157 = por %p155, %p156
    %p158 = scmp.le.s32.totalorder 1, %s10
    %p159 = scmp.lt.s32.totalorder %s10, 5
    %p160 = pnand %p158, %p159
    %p161 = pneg %p160
    // Predicated region
    $region9: #{scalar_head.1} parent=5 // pred_check
      _
    $region10: #{scalar_head.1} parent=5 // pred_check_branch
      %163 = sbr.rel (%p160) target = $region12
    $region11: #{scalar_head.1} parent=5 // pred_region
      %s164 = ssub.s32 %s10, 1
      // Predicated region
      $region13: #{scalar_head.1} parent=11 // pred_check
        %p165 = pneg %p103
      $region14: #{scalar_head.1} parent=11 // pred_check_branch
        %167 = sbr.rel (%p165) target = $region16
      $region15: #{scalar_head.1} parent=11 // pred_region
        _
      $region16: #{scalar_head.1} parent=11 // pred_fallthru
        _
      // Predicated region
      $region17: #{scalar_head.1} parent=11 // pred_check
        %p168 = pneg %p124
      $region18: #{scalar_head.1} parent=11 // pred_check_branch
        %170 = sbr.rel (%p168) target = $region20
      $region19: #{scalar_head.1} parent=11 // pred_region
        _
      $region20: #{scalar_head.1} parent=11 // pred_fallthru
        _
    $region12: #{scalar_head.1} parent=5 // pred_fallthru
      _
    %p171 = scmp.lt.s32.totalorder %s10, 4
    // Predicated region
    $region21: #{scalar_head.1} parent=5 // pred_check
      %p172 = pneg %p171
    $region22: #{scalar_head.1} parent=5 // pred_check_branch
      %174 = sbr.rel (%p172) target = $region24
    $region23: #{scalar_head.1} parent=5 // pred_region
      // Predicated region
      $region25: #{scalar_head.1} parent=23 // pred_check
        %p175 = pneg %p46
      $region26: #{scalar_head.1} parent=23 // pred_check_branch
        %177 = sbr.rel (%p175) target = $region28
      $region27: #{scalar_head.1} parent=23 // pred_region
        %s178 = smul.u32 %s17, 2
        %s179 = sadd.s32 %s178, %s18
        %s180 = smul.u32 16, %s179
        %p181 = scmp.lt.s32.totalorder %s180, 63
        %s182 = scalar_select %p181, %s180, 63
        %s183 = smul.addr %s182, 8
        %s184 = scalar_lea.vmem %s0, %s183
        %s185 = smul.u32 %s17, 2
        %s186 = sadd.s32 %s185, %s18
        %s187 = smul.u32 16, %s186
      $region28: #{scalar_head.1} parent=23 // pred_fallthru
        _
      // Predicated region
      $region29: #{scalar_head.1} parent=23 // pred_check
        %p188 = pneg %p76
      $region30: #{scalar_head.1} parent=23 // pred_check_branch
        %190 = sbr.rel (%p188) target = $region32
      $region31: #{scalar_head.1} parent=23 // pred_region
        %s191 = smul.u32 %s17, 2
        %s192 = sadd.s32 %s191, %s18
        %p193 = scmp.lt.s32.totalorder %s192, 3
        %s194 = scalar_select %p193, %s192, 3
        %s195 = scalar_lea.vmem %s1, %s194
        %s196 = smul.u32 %s17, 2
        %s197 = sadd.s32 %s196, %s18
      $region32: #{scalar_head.1} parent=23 // pred_fallthru
        _
    $region24: #{scalar_head.1} parent=5 // pred_fallthru
      _
    %p198 = scmp.le.s32.totalorder 1, %s10
    %p199 = scmp.lt.s32.totalorder %s10, 5
    %p200 = pnand %p198, %p199
    %p201 = pneg %p200
    // Predicated region
    $region33: #{scalar_head.1} parent=5 // pred_check
      _
    $region34: #{scalar_head.1} parent=5 // pred_check_branch
      %203 = sbr.rel (%p200) target = $region36
    $region35: #{scalar_head.1} parent=5 // pred_region
      %s204 = ssub.s32 %s10, 1
      %s205 = smul.u32 %s19, 2
      %s206 = sadd.s32 %s205, %s20
      %s207 = smul.u32 16, %s206
      %p208 = scmp.lt.s32.totalorder %s207, 63
      %s209 = scalar_select %p208, %s207, 63
      %s210 = smul.addr %s209, 8
      %s211 = scalar_lea.vmem %s0, %s210
      %p212 = pneg %p52
      %p213 = pneg %p49
      %s214 = smul.u32 %s19, 2
      %s215 = sadd.s32 %s214, %s20
      %p216 = scmp.lt.s32.totalorder %s215, 3
      %s217 = scalar_select %p216, %s215, 3
      %s218 = scalar_lea.vmem %s1, %s217
      %p219 = pneg %p82
      %p220 = pneg %p79
      %p221 = pneg %p103
      %p222 = pneg %p100
      %p223 = pneg %p124
      %p224 = pneg %p121
      %p225 = pneg %p150
      %p226 = pneg %p147
      %p227 = scmp.lt.s32.totalorder %s19, 1
      %s228 = scalar_select %p227, %s19, 1
      %s229 = smul.addr %s228, 4
      %s230 = scalar_lea.vmem %s4, %s229
      %s231 = smul.u32 %s19, 2
      %s232 = sadd.s32 %s231, %s20
      %s233 = smul.u32 16, %s232
      %p234 = scmp.lt.s32.totalorder %s233, 63
      %s235 = scalar_select %p234, %s233, 63
      %s236 = smul.addr %s235, 8
      %s237 = scalar_lea.vmem %s0, %s236
      %s238 = smul.u32 %s19, 2
      %s239 = sadd.s32 %s238, %s20
      %s240 = smul.u32 16, %s239
      %s241 = smul.u32 %s19, 2
      %s242 = sadd.s32 %s241, %s20
      %p243 = scmp.lt.s32.totalorder %s242, 3
      %s244 = scalar_select %p243, %s242, 3
      %s245 = scalar_lea.vmem %s1, %s244
      %s246 = smul.u32 %s19, 2
      %s247 = sadd.s32 %s246, %s20
      %p248 = scmp.lt.s32.totalorder %s19, 1
      %s249 = scalar_select %p248, %s19, 1
      %s250 = smul.addr %s249, 4
      %s251 = scalar_lea.vmem %s4, %s250
      %p254 = scmp.eq.s32.totalorder %s20, 0
      // Predicated region
      $region37: #{scalar_head.1} parent=35 // pred_check
        %p255 = pneg %p254
      $region38: #{scalar_head.1} parent=35 // pred_check_branch
        %257 = sbr.rel (%p255) target = $region40
      $region39: #{scalar_head.1} parent=35 // pred_region
        %vm258 = vcmask 134144
        %259 = vst.msk [vmem:[%s251] sm:$0xf] %vm258, 0.0
      $region40: #{scalar_head.1} parent=35 // pred_fallthru
        _
      %v260 = vld [vmem:[%s237] sm:$0xff]
      %v261 = vld [vmem:[%s237 + $0x8] sm:$0xff]
      %v262 = vld [vmem:[%s237 + $0x10] sm:$0xff]
      %v263 = vld [vmem:[%s237 + $0x18] sm:$0xff]
      %v264 = vld [vmem:[%s237 + $0x20] sm:$0xff]
      %v265 = vld [vmem:[%s237 + $0x28] sm:$0xff]
      %v266 = vld [vmem:[%s237 + $0x30] sm:$0xff]
      %v267 = vld [vmem:[%s237 + $0x38] sm:$0xff]
      %v268 = vld [vmem:[%s237 + $0x40] sm:$0xff]
      %v269 = vld [vmem:[%s237 + $0x48] sm:$0xff]
      %v270 = vld [vmem:[%s237 + $0x50] sm:$0xff]
      %v271 = vld [vmem:[%s237 + $0x58] sm:$0xff]
      %v272 = vld [vmem:[%s237 + $0x60] sm:$0xff]
      %v273 = vld [vmem:[%s237 + $0x68] sm:$0xff]
      %v274 = vld [vmem:[%s237 + $0x70] sm:$0xff]
      %v275 = vld [vmem:[%s237 + $0x78] sm:$0xff]
      %v276 = vpack.c.bf16 %v261, %v260
      %v277 = vpack.c.bf16 %v263, %v262
      %v278 = vpack.c.bf16 %v265, %v264
      %v279 = vpack.c.bf16 %v267, %v266
      %v280 = vpack.c.bf16 %v269, %v268
      %v281 = vpack.c.bf16 %v271, %v270
      %v282 = vpack.c.bf16 %v273, %v272
      %v283 = vpack.c.bf16 %v275, %v274
      %v284 = vld [vmem:[%s2] sm:$0xff]
      %v285 = vld [vmem:[%s2 + $0x8] sm:$0xff]
      %v286 = vld [vmem:[%s2 + $0x10] sm:$0xff]
      %v287 = vld [vmem:[%s2 + $0x18] sm:$0xff]
      %v288 = vpack.c.bf16 %v285, %v284
      %v289 = vpack.c.bf16 %v287, %v286
      %v290 = vld [vmem:[%s3] sm:$0x1]
      %v292 = vlaneseq
      %v293 = vshrl.u32 %v292, 7
      %v294 = vsub.s32 0, %v293
      %v295 = vrot.slane %v290, %v294
      %vm297 = vcmask 261120
      %v299 = vsel %vm297, %v276, 0
      %v302 = vsel %vm297, %v277, 0
      %v305 = vsel %vm297, %v278, 0
      %v308 = vsel %vm297, %v279, 0
      %v311 = vsel %vm297, %v280, 0
      %v314 = vsel %vm297, %v281, 0
      %v317 = vsel %vm297, %v282, 0
      %v320 = vsel %vm297, %v283, 0
      %322 = vmatprep.subr.bf16.mxu0 0
      %323 = vmatpush1.bf16.msra.mxu0 0
      %324 = vmatprep.subr.bf16.mxu0 0
      %325 = vmatpush1.bf16.msra.mxu0 0
      %326 = vmatprep.subr.bf16.mxu0 0
      %327 = vmatpush1.bf16.msra.mxu0 0
      %328 = vmatprep.subr.bf16.mxu0 0
      %329 = vmatpush1.bf16.msra.mxu0 0
      %330 = vmatprep.subr.bf16.mxu0 0
      %331 = vmatpush1.bf16.msra.mxu0 0
      %332 = vmatprep.subr.bf16.mxu0 0
      %333 = vmatpush1.bf16.msra.mxu0 0
      %334 = vmatprep.subr.bf16.mxu0 0
      %335 = vmatpush1.bf16.msra.mxu0 %v289
      %336 = vmatprep.subr.bf16.mxu0 0
      %337 = vmatpush1.bf16.msra.mxu0 %v288
      %338 = vmatprep.subr.bf16.mxu0 0
      %339 = vmatpush2.bf16.msra.mxu0 0
      %340 = vmatprep.subr.bf16.mxu0 0
      %341 = vmatpush2.bf16.msra.mxu0 0
      %342 = vmatprep.subr.bf16.mxu0 0
      %343 = vmatpush2.bf16.msra.mxu0 0
      %344 = vmatprep.subr.bf16.mxu0 0
      %345 = vmatpush2.bf16.msra.mxu0 0
      %346 = vmatprep.subr.bf16.mxu0 0
      %347 = vmatpush2.bf16.msra.mxu0 0
      %348 = vmatprep.subr.bf16.mxu0 0
      %349 = vmatpush2.bf16.msra.mxu0 0
      %350 = vmatprep.subr.bf16.mxu0 0
      %351 = vmatpush2.bf16.msra.mxu0 0
      %352 = vmatprep.subr.bf16.mxu0 0
      %353 = vmatpush2.bf16.msra.mxu0 0
      %354 = vmatprep.mubr.bf16.mxu0 0
      %355 = vmatmul.mubr.bf16.gmra.mxu0 %v299
      %v356 = vpop.f32.mrf.mxu0
      %v357 = vadd.f32 %v295, %v356
      %v358 = vpop.f32.mrf.mxu0
      %v359 = vpop.f32.mrf.mxu0
      %v360 = vadd.f32 %v295, %v359
      %v361 = vpop.f32.mrf.mxu0
      %362 = vmatprep.mubr.bf16.mxu0 0
      %363 = vmatmul.mubr.bf16.gmra.mxu0 %v302
      %v364 = vpop.f32.mrf.mxu0
      %v365 = vadd.f32 %v295, %v364
      %v366 = vpop.f32.mrf.mxu0
      %v367 = vpop.f32.mrf.mxu0
      %v368 = vadd.f32 %v295, %v367
      %v369 = vpop.f32.mrf.mxu0
      %370 = vmatprep.mubr.bf16.mxu0 0
      %371 = vmatmul.mubr.bf16.gmra.mxu0 %v305
      %v372 = vpop.f32.mrf.mxu0
      %v373 = vadd.f32 %v295, %v372
      %v374 = vpop.f32.mrf.mxu0
      %v375 = vpop.f32.mrf.mxu0
      %v376 = vadd.f32 %v295, %v375
      %v377 = vpop.f32.mrf.mxu0
      %378 = vmatprep.mubr.bf16.mxu0 0
      %379 = vmatmul.mubr.bf16.gmra.mxu0 %v308
      %v380 = vpop.f32.mrf.mxu0
      %v381 = vadd.f32 %v295, %v380
      %v382 = vpop.f32.mrf.mxu0
      %v383 = vpop.f32.mrf.mxu0
      %v384 = vadd.f32 %v295, %v383
      %v385 = vpop.f32.mrf.mxu0
      %386 = vmatprep.mubr.bf16.mxu0 0
      %387 = vmatmul.mubr.bf16.gmra.mxu0 %v311
      %v388 = vpop.f32.mrf.mxu0
      %v389 = vadd.f32 %v295, %v388
      %v390 = vpop.f32.mrf.mxu0
      %v391 = vpop.f32.mrf.mxu0
      %v392 = vadd.f32 %v295, %v391
      %v393 = vpop.f32.mrf.mxu0
      %394 = vmatprep.mubr.bf16.mxu0 0
      %395 = vmatmul.mubr.bf16.gmra.mxu0 %v314
      %v396 = vpop.f32.mrf.mxu0
      %v397 = vadd.f32 %v295, %v396
      %v398 = vpop.f32.mrf.mxu0
      %v399 = vpop.f32.mrf.mxu0
      %v400 = vadd.f32 %v295, %v399
      %v401 = vpop.f32.mrf.mxu0
      %402 = vmatprep.mubr.bf16.mxu0 0
      %403 = vmatmul.mubr.bf16.gmra.mxu0 %v317
      %v404 = vpop.f32.mrf.mxu0
      %v405 = vadd.f32 %v295, %v404
      %v406 = vpop.f32.mrf.mxu0
      %v407 = vpop.f32.mrf.mxu0
      %v408 = vadd.f32 %v295, %v407
      %v409 = vpop.f32.mrf.mxu0
      %410 = vmatprep.mubr.bf16.mxu0 0
      %411 = vmatmul.mubr.bf16.gmra.mxu0 %v320
      %v412 = vpop.f32.mrf.mxu0
      %v413 = vadd.f32 %v295, %v412
      %v414 = vpop.f32.mrf.mxu0
      %v415 = vpop.f32.mrf.mxu0
      %v416 = vadd.f32 %v295, %v415
      %v417 = vpop.f32.mrf.mxu0
      %418 = vdwg.mxu0
      %v419 = vxor.u32 %v357, 2147483648
      %v420 = vxor.u32 %v360, 2147483648
      %v421 = vxor.u32 %v365, 2147483648
      %v422 = vxor.u32 %v368, 2147483648
      %v423 = vxor.u32 %v373, 2147483648
      %v424 = vxor.u32 %v376, 2147483648
      %v425 = vxor.u32 %v381, 2147483648
      %v426 = vxor.u32 %v384, 2147483648
      %v427 = vxor.u32 %v389, 2147483648
      %v428 = vxor.u32 %v392, 2147483648
      %v429 = vxor.u32 %v397, 2147483648
      %v430 = vxor.u32 %v400, 2147483648
      %v431 = vxor.u32 %v405, 2147483648
      %v432 = vxor.u32 %v408, 2147483648
      %v433 = vxor.u32 %v413, 2147483648
      %v434 = vxor.u32 %v416, 2147483648
      %v435 = vmul.f32 %v419, 1.442695
      %v436 = vpow.pop %v435
      %v437 = vmul.f32 %v420, 1.442695
      %v438 = vpow.pop %v437
      %v439 = vmul.f32 %v421, 1.442695
      %v440 = vpow.pop %v439
      %v441 = vmul.f32 %v422, 1.442695
      %v442 = vpow.pop %v441
      %v443 = vmul.f32 %v423, 1.442695
      %v444 = vpow.pop %v443
      %v445 = vmul.f32 %v424, 1.442695
      %v446 = vpow.pop %v445
      %v447 = vmul.f32 %v425, 1.442695
      %v448 = vpow.pop %v447
      %v449 = vmul.f32 %v426, 1.442695
      %v450 = vpow.pop %v449
      %v451 = vmul.f32 %v427, 1.442695
      %v452 = vpow.pop %v451
      %v453 = vmul.f32 %v428, 1.442695
      %v454 = vpow.pop %v453
      %v455 = vmul.f32 %v429, 1.442695
      %v456 = vpow.pop %v455
      %v457 = vmul.f32 %v430, 1.442695
      %v458 = vpow.pop %v457
      %v459 = vmul.f32 %v431, 1.442695
      %v460 = vpow.pop %v459
      %v461 = vmul.f32 %v432, 1.442695
      %v462 = vpow.pop %v461
      %v463 = vmul.f32 %v433, 1.442695
      %v464 = vpow.pop %v463
      %v465 = vmul.f32 %v434, 1.442695
      %v466 = vpow.pop %v465
      %v467 = vadd.f32 %v436, 1.0
      %v468 = vadd.f32 %v438, 1.0
      %v469 = vadd.f32 %v440, 1.0
      %v470 = vadd.f32 %v442, 1.0
      %v471 = vadd.f32 %v444, 1.0
      %v472 = vadd.f32 %v446, 1.0
      %v473 = vadd.f32 %v448, 1.0
      %v474 = vadd.f32 %v450, 1.0
      %v475 = vadd.f32 %v452, 1.0
      %v476 = vadd.f32 %v454, 1.0
      %v477 = vadd.f32 %v456, 1.0
      %v478 = vadd.f32 %v458, 1.0
      %v479 = vadd.f32 %v460, 1.0
      %v480 = vadd.f32 %v462, 1.0
      %v481 = vadd.f32 %v464, 1.0
      %v482 = vadd.f32 %v466, 1.0
      %v483 = vrcp.pop %v467
      %v484 = vmul.f32 1.0, %v483
      %v485 = vrcp.pop %v468
      %v486 = vmul.f32 1.0, %v485
      %v487 = vrcp.pop %v469
      %v488 = vmul.f32 1.0, %v487
      %v489 = vrcp.pop %v470
      %v490 = vmul.f32 1.0, %v489
      %v491 = vrcp.pop %v471
      %v492 = vmul.f32 1.0, %v491
      %v493 = vrcp.pop %v472
      %v494 = vmul.f32 1.0, %v493
      %v495 = vrcp.pop %v473
      %v496 = vmul.f32 1.0, %v495
      %v497 = vrcp.pop %v474
      %v498 = vmul.f32 1.0, %v497
      %v499 = vrcp.pop %v475
      %v500 = vmul.f32 1.0, %v499
      %v501 = vrcp.pop %v476
      %v502 = vmul.f32 1.0, %v501
      %v503 = vrcp.pop %v477
      %v504 = vmul.f32 1.0, %v503
      %v505 = vrcp.pop %v478
      %v506 = vmul.f32 1.0, %v505
      %v507 = vrcp.pop %v479
      %v508 = vmul.f32 1.0, %v507
      %v509 = vrcp.pop %v480
      %v510 = vmul.f32 1.0, %v509
      %v511 = vrcp.pop %v481
      %v512 = vmul.f32 1.0, %v511
      %v513 = vrcp.pop %v482
      %v514 = vmul.f32 1.0, %v513
      %v515 = vmul.f32 %v357, %v484
      %v516 = vmul.f32 %v360, %v486
      %v517 = vmul.f32 %v365, %v488
      %v518 = vmul.f32 %v368, %v490
      %v519 = vmul.f32 %v373, %v492
      %v520 = vmul.f32 %v376, %v494
      %v521 = vmul.f32 %v381, %v496
      %v522 = vmul.f32 %v384, %v498
      %v523 = vmul.f32 %v389, %v500
      %v524 = vmul.f32 %v392, %v502
      %v525 = vmul.f32 %v397, %v504
      %v526 = vmul.f32 %v400, %v506
      %v527 = vmul.f32 %v405, %v508
      %v528 = vmul.f32 %v408, %v510
      %v529 = vmul.f32 %v413, %v512
      %v530 = vmul.f32 %v416, %v514
      %v531 = vld [vmem:[%s245] sm:$0x1]
      %v532 = vlaneseq
      %v533 = vshrl.u32 %v532, 7
      %v534 = vlaneseq
      %v535 = vshrl.u32 %v534, 7
      %v536 = vsub.s32 0, %v535
      %v537 = vrot.slane %v531, %v536
      %vm538 = vcmp.eq.s32.totalorder %v533, %v537
      %v539 = vsel %vm538, 1, 0
      %v540 = vcvt.s32.f32 %v539
      %v541 = vpack.c.bf16 %v540, %v540
      %v542 = vpack.c.bf16 %v516, %v515
      %v543 = vpack.c.bf16 %v518, %v517
      %v544 = vpack.c.bf16 %v520, %v519
      %v545 = vpack.c.bf16 %v522, %v521
      %v546 = vpack.c.bf16 %v524, %v523
      %v547 = vpack.c.bf16 %v526, %v525
      %v548 = vpack.c.bf16 %v528, %v527
      %v549 = vpack.c.bf16 %v530, %v529
      %v550 = vld [vmem:[%s251] sm:$0xf]
      %551 = vmatprep.subr.bf16.mxu0 0
      %552 = vmatpush1.bf16.msra.mxu0 %v549
      %553 = vmatprep.subr.bf16.mxu0 0
      %554 = vmatpush1.bf16.msra.mxu0 %v548
      %555 = vmatprep.subr.bf16.mxu0 0
      %556 = vmatpush1.bf16.msra.mxu0 %v547
      %557 = vmatprep.subr.bf16.mxu0 0
      %558 = vmatpush1.bf16.msra.mxu0 %v546
      %559 = vmatprep.subr.bf16.mxu0 0
      %560 = vmatpush1.bf16.msra.mxu0 %v545
      %561 = vmatprep.subr.bf16.mxu0 0
      %562 = vmatpush1.bf16.msra.mxu0 %v544
      %563 = vmatprep.subr.bf16.mxu0 0
      %564 = vmatpush1.bf16.msra.mxu0 %v543
      %565 = vmatprep.subr.bf16.mxu0 0
      %566 = vmatpush1.bf16.msra.mxu0 %v542
      %567 = vmatprep.subr.bf16.mxu0 0
      %568 = vmatpush2.bf16.msra.mxu0 0
      %569 = vmatprep.subr.bf16.mxu0 0
      %570 = vmatpush2.bf16.msra.mxu0 0
      %571 = vmatprep.subr.bf16.mxu0 0
      %572 = vmatpush2.bf16.msra.mxu0 0
      %573 = vmatprep.subr.bf16.mxu0 0
      %574 = vmatpush2.bf16.msra.mxu0 0
      %575 = vmatprep.subr.bf16.mxu0 0
      %576 = vmatpush2.bf16.msra.mxu0 0
      %577 = vmatprep.subr.bf16.mxu0 0
      %578 = vmatpush2.bf16.msra.mxu0 0
      %579 = vmatprep.subr.bf16.mxu0 0
      %580 = vmatpush2.bf16.msra.mxu0 0
      %581 = vmatprep.subr.bf16.mxu0 0
      %582 = vmatpush2.bf16.msra.mxu0 0
      %583 = vmatprep.mubr.bf16.mxu0 0
      %584 = vmatmul.mubr.bf16.gmra.mxu0 %v541
      %v585 = vpop.f32.mrf.mxu0
      %v586 = vadd.f32 0.0, %v585
      %v587 = vpop.f32.mrf.mxu0
      %v588 = vpop.f32.mrf.mxu0
      %v589 = vpop.f32.mrf.mxu0
      %590 = vdwg.mxu0
      %v591 = vadd.f32 %v550, %v586
      %vm592 = vcmask 125952
      %593 = vst.msk [vmem:[%s251] sm:$0xf] %vm592, %v591
      %v594 = vld [vmem:[%s251] sm:$0xf]
      %595 = vmatprep.subr.bf16.mxu0 0
      %596 = vmatpush1.bf16.msra.mxu0 1065369472
      %597 = vmatprep.subr.bf16.mxu0 0
      %598 = vmatpush1.bf16.msra.mxu0 1065369472
      %599 = vmatprep.subr.bf16.mxu0 0
      %600 = vmatpush1.bf16.msra.mxu0 1065369472
      %601 = vmatprep.subr.bf16.mxu0 0
      %602 = vmatpush1.bf16.msra.mxu0 1065369472
      %603 = vmatprep.subr.bf16.mxu0 0
      %604 = vmatpush1.bf16.msra.mxu0 1065369472
      %605 = vmatprep.subr.bf16.mxu0 0
      %606 = vmatpush1.bf16.msra.mxu0 1065369472
      %607 = vmatprep.subr.bf16.mxu0 0
      %608 = vmatpush1.bf16.msra.mxu0 1065369472
      %609 = vmatprep.subr.bf16.mxu0 0
      %610 = vmatpush1.bf16.msra.mxu0 1065369472
      %611 = vmatprep.subr.bf16.mxu0 0
      %612 = vmatpush2.bf16.msra.mxu0 0
      %613 = vmatprep.subr.bf16.mxu0 0
      %614 = vmatpush2.bf16.msra.mxu0 0
      %615 = vmatprep.subr.bf16.mxu0 0
      %616 = vmatpush2.bf16.msra.mxu0 0
      %617 = vmatprep.subr.bf16.mxu0 0
      %618 = vmatpush2.bf16.msra.mxu0 0
      %619 = vmatprep.subr.bf16.mxu0 0
      %620 = vmatpush2.bf16.msra.mxu0 0
      %621 = vmatprep.subr.bf16.mxu0 0
      %622 = vmatpush2.bf16.msra.mxu0 0
      %623 = vmatprep.subr.bf16.mxu0 0
      %624 = vmatpush2.bf16.msra.mxu0 0
      %625 = vmatprep.subr.bf16.mxu0 0
      %626 = vmatpush2.bf16.msra.mxu0 0
      %627 = vmatprep.mubr.bf16.mxu0 0
      %628 = vmatmul.mubr.bf16.gmra.mxu0 %v541
      %v629 = vpop.f32.mrf.mxu0
      %v630 = vadd.f32 0.0, %v629
      %v631 = vpop.f32.mrf.mxu0
      %v632 = vpop.f32.mrf.mxu0
      %v633 = vpop.f32.mrf.mxu0
      %634 = vdwg.mxu0
      %636 = vrot.lane.b32.xlu0 %v630, 16
      %v637 = vpop.permute.xlu0 %636
      %v639 = vadd.f32 %v594, %v637
      %vm640 = vcmask 134272
      %641 = vst.msk [vmem:[%s251] sm:$0xf] %vm640, %v639
      %p642 = scmp.lt.s32.totalorder %s19, 1
      %s643 = scalar_select %p642, %s19, 1
      %s644 = smul.addr %s643, 4
      %s645 = scalar_lea.vmem %s4, %s644
      // Predicated region
      $region41: #{scalar_head.1} parent=35 // pred_check
        %p646 = pneg %p147
      $region42: #{scalar_head.1} parent=35 // pred_check_branch
        %648 = sbr.rel (%p646) target = $region44
      $region43: #{scalar_head.1} parent=35 // pred_region
        _
      $region44: #{scalar_head.1} parent=35 // pred_fallthru
        _
    $region36: #{scalar_head.1} parent=5 // pred_fallthru
      _
    %p649 = scmp.le.s32.totalorder 2, %s10
    // Predicated region
    $region45: #{scalar_head.1} parent=5 // pred_check
      %p650 = pneg %p649
    $region46: #{scalar_head.1} parent=5 // pred_check_branch
      %652 = sbr.rel (%p650) target = $region48
    $region47: #{scalar_head.1} parent=5 // pred_region
      %s653 = ssub.s32 %s10, 2
      // Predicated region
      $region49: #{scalar_head.1} parent=47 // pred_check
        %p654 = pneg %p153
      $region50: #{scalar_head.1} parent=47 // pred_check_branch
        %656 = sbr.rel (%p654) target = $region52
      $region51: #{scalar_head.1} parent=47 // pred_region
        %p657 = scmp.lt.s32.totalorder %s21, 1
        %s658 = scalar_select %p657, %s21, 1
        %s659 = smul.addr %s658, 4
        %s660 = scalar_lea.vmem %s4, %s659
      $region52: #{scalar_head.1} parent=47 // pred_fallthru
        _
    $region48: #{scalar_head.1} parent=5 // pred_fallthru
      _
  $region6: #{scalar_head.1} parent=0 // loop_footer
    %s14 = sadd.s32 1, %s10
  $region7: #{scalar_head.1} parent=0 // loop_footer_branch
    %9 = sbr.rel target = $region3
  $region8: #{scalar_head.1} parent=0 // loop_exit
    _

</llo_original>
